<compile_context>
chip_gen: v7x
topology: tpu7x:2x2x1
jax: 0.10.0
libtpu: 0.0.40
codegen_flags: <defaults>
</compile_context>

<pallas_src>
import jax
import jax.numpy as jnp
from jax.experimental import pallas as pl
from jax.experimental.pallas import tpu as pltpu


def _round_up(a: int, b: int) -> int:
    return (a + b - 1) // b * b


# ---------------------------------------------------------------------------
# Kernel body.  Grid = (row_tiles i, out_tiles j, k_tiles k); k tiles the
# hidden (inner) dimension and is the trailing "arbitrary" reduction axis.
# ---------------------------------------------------------------------------
def _ff_kernel(x_ref, w1_ref, b1_ref, w2_ref, b2_ref, o_ref, acc_ref):
    # x_ref:  (tm, dim)      token tile (constant across j,k -> fetched once per i)
    # w1_ref: (dim, tk)      W1 column slab
    # b1_ref: (1, tk)        b1 slab
    # w2_ref: (tk, tn)       W2 tile
    # b2_ref: (1, tn)        b2 slab (added once at finalize)
    # o_ref:  (tm, tn)       output tile (written at last k)
    # acc_ref:(tm, tn) f32   accumulator scratch
    k = pl.program_id(2)

    @pl.when(k == 0)
    def _init():
        acc_ref[...] = jnp.zeros_like(acc_ref)

    x = x_ref[...]
    # project_in slice: x @ W1[:, k] + b1[k]   (f32 accumulation on the MXU)
    h = jnp.dot(x, w1_ref[...], preferred_element_type=jnp.float32) + b1_ref[...]
    h = h * jax.nn.sigmoid(h)  # SiLU in f32 (EUP)
    # Dropout(p=0.0) at inference -> identity; post_act_ln=False -> no LayerNorm.
    # TODO(synk): training-mode dropout (p>0) and the post_act_ln=True LayerNorm
    # branch are not emitted (module defaults: dropout=0.0, post_act_ln=False).
    acc_ref[...] += jnp.dot(h.astype(w2_ref.dtype), w2_ref[...],
                            preferred_element_type=jnp.float32)

    @pl.when(k == pl.num_programs(2) - 1)
    def _finalize():
        o_ref[...] = (acc_ref[...] + b2_ref[...]).astype(o_ref.dtype)


# ---------------------------------------------------------------------------
# BlockSpec helper: optional non-default buffer count (1 = single-buffered
# resident weights; 3 = deeper pipeline for exposed DMA on v5e).
# ---------------------------------------------------------------------------
def _spec(shape, index_map, buffers=2):
    if buffers != 2 and hasattr(pl, "Buffered"):
        try:
            return pl.BlockSpec(shape, index_map, pipeline_mode=pl.Buffered(buffers))
        except TypeError:
            pass  # older API without pipeline_mode: fall back to default buffering
    return pl.BlockSpec(shape, index_map)


def _default_vmem_limit() -> int:
    """~80% of physical VMEM: ~51 MiB on v7x (64 MiB), ~102 MiB on v5e/v6e (128 MiB)."""
    phys = None
    try:
        phys = getattr(pltpu.get_tpu_info(), "vmem_capacity_bytes", None)
    except Exception:
        phys = None
    if not phys:
        phys = 64 * 1024 * 1024  # conservative fallback = v7x per-TensorCore VMEM
    return int(phys * 0.8)


def _choose_tiling(N, dim, inner, dim_out, act_bytes, wt_bytes, budget, row_align,
                   row_tile=None, inner_tile=None, out_tile=None, weight_buffers=2):
    """Pick (tm, tk, tn) from an explicit VMEM byte budget."""
    n_rows = _round_up(max(N, 1), row_align)

    if row_tile is not None:
        tm_cands = [_round_up(int(row_tile), row_align)]
    else:
        base = (512, 256, 128, 64, 32, 16, 8)
        tm_cands = sorted({_round_up(min(c, n_rows), row_align) for c in base},
                          reverse=True)

    if inner_tile is not None:
        tk_cands = [int(inner_tile)]
    else:
        tk_cands = [inner]                       # weight-resident first (num_k == 1)
        for c in (2048, 1024, 512, 256):         # keep K >= 256 (MXU systolic depth)
            if c < inner and inner % c == 0:
                tk_cands.append(c)
        if len(tk_cands) == 1 and inner > 128 and inner % 128 == 0:
            tk_cands.append(128)                 # last-resort fallback

    tn0 = int(out_tile) if out_tile is not None else dim_out

    def fits(tm, tk, tn):
        num_k = max(inner // tk, 1)
        n_j = dim_out // tn
        w1_buf = 1 if num_k == 1 else weight_buffers
        w2_buf = 1 if (num_k == 1 and n_j == 1) else weight_buffers
        b1_buf = 1 if num_k == 1 else 2
        b2_buf = 1 if n_j == 1 else 2
        total = 2 * tm * dim * act_bytes        # x tile (double-buffered)
        total += 2 * tm * tn * act_bytes        # out tile (double-buffered)
        total += tm * tn * 4                    # f32 accumulator scratch
        total += w1_buf * dim * tk * wt_bytes
        total += b1_buf * tk * wt_bytes
        total += w2_buf * tk * tn * wt_bytes
        total += b2_buf * tn * wt_bytes
        return total <= budget

    chosen = None
    if row_tile is not None and inner_tile is not None:
        chosen = (tm_cands[0], tk_cands[0], tn0)
    else:
        resident_floor = min(128, n_rows)  # don't shrink the row tile absurdly just
        for tk in tk_cands:                # to keep weights resident
            num_k = max(inner // tk, 1)
            for tm in tm_cands:
                if num_k == 1 and row_tile is None and tm < resident_floor:
                    continue
                if fits(tm, tk, tn0):
                    chosen = (tm, tk, tn0)
                    break
            if chosen is not None:
                break
        if chosen is None:  # best effort: smallest row tile, smallest k tile
            chosen = (tm_cands[-1], tk_cands[-1], tn0)

    tm, tk, tn = chosen

    # Megacore (v7x) heuristic for decode-sized N: a single row tile leaves one
    # TensorCore idle, so split dim_out into two column tiles.
    if out_tile is None:
        n_i = _round_up(max(N, 1), tm) // tm
        num_k = max(inner // tk, 1)
        if (n_i == 1 and num_k == 1 and tn == dim_out
                and dim_out >= 512 and dim_out % 256 == 0):
            tn = dim_out // 2

    return tm, tk, tn


# ---------------------------------------------------------------------------
# Public wrapper: x (B, S, dim) -> (B, S, dim_out)
# ---------------------------------------------------------------------------
def feedforward_pallas(x, w1, b1, w2, b2, *, row_tile=None, inner_tile=None,
                       out_tile=None, vmem_limit_bytes=None, weight_buffers=2):
    B, S, dim = x.shape
    inner = w1.shape[1]
    dim_out = w2.shape[1]
    N = B * S
    x2d = x.reshape(N, dim)
    b1 = jnp.reshape(b1, (1, inner))
    b2 = jnp.reshape(b2, (1, dim_out))

    if vmem_limit_bytes is None:
        vmem_limit_bytes = _default_vmem_limit()
    # Leave headroom for Mosaic internal scratch / DMA descriptors.
    budget = max(vmem_limit_bytes - 4 * 1024 * 1024, vmem_limit_bytes // 2)

    act_bytes = jnp.dtype(x.dtype).itemsize
    wt_bytes = jnp.dtype(w1.dtype).itemsize
    row_align = 16 if act_bytes < 4 else 8  # sublane packing (bf16 vs f32)

    tm, tk, tn = _choose_tiling(N, dim, inner, dim_out, act_bytes, wt_bytes,
                                budget, row_align, row_tile=row_tile,
                                inner_tile=inner_tile, out_tile=out_tile,
                                weight_buffers=weight_buffers)

    assert inner % tk == 0, "inner_tile must divide the hidden dimension"
    assert dim_out % tn == 0, "out_tile must divide dim_out"
    num_k = inner // tk
    n_j = dim_out // tn

    n_pad = _round_up(N, tm)
    if n_pad != N:
        x2d = jnp.pad(x2d, ((0, n_pad - N), (0, 0)))
    n_i = n_pad // tm
    grid = (n_i, n_j, num_k)

    # Buffer counts: resident (constant-index) weights are single-buffered.
    w1_buf = 1 if num_k == 1 else weight_buffers
    b1_buf = 1 if num_k == 1 else 2
    w2_buf = 1 if (num_k == 1 and n_j == 1) else weight_buffers
    b2_buf = 1 if n_j == 1 else 2

    # Cost estimate reflecting actual HBM traffic (weight re-streaming when the
    # k block index resets at every (i, j), project_in recompute per j tile).
    w1_reads = 1 if num_k == 1 else n_i * n_j
    w2_reads = 1 if (num_k == 1 and n_j == 1) else n_i
    cost = pl.CostEstimate(
        flops=int(2 * n_pad * dim * inner * n_j + 2 * n_pad * inner * dim_out),
        transcendentals=int(n_pad * inner * n_j),  # sigmoid for SiLU
        bytes_accessed=int(
            (n_pad * dim + n_pad * dim_out) * act_bytes
            + w1_reads * (dim * inner + inner) * wt_bytes
            + w2_reads * inner * dim_out * wt_bytes
            + max(n_j, 1) * dim_out * wt_bytes),
    )

    out2d = pl.pallas_call(
        _ff_kernel,
        out_shape=jax.ShapeDtypeStruct((n_pad, dim_out), x.dtype),
        grid_spec=pltpu.PrefetchScalarGridSpec(
            num_scalar_prefetch=0,
            grid=grid,
            in_specs=[
                pl.BlockSpec((tm, dim), lambda i, j, k: (i, 0)),           # x tile
                _spec((dim, tk), lambda i, j, k: (0, k), buffers=w1_buf),  # W1 slab
                _spec((1, tk), lambda i, j, k: (0, k), buffers=b1_buf),    # b1 slab
                _spec((tk, tn), lambda i, j, k: (k, j), buffers=w2_buf),   # W2 tile
                _spec((1, tn), lambda i, j, k: (0, j), buffers=b2_buf),    # b2 slab
            ],
            out_specs=pl.BlockSpec((tm, tn), lambda i, j, k: (i, j)),
            scratch_shapes=[pltpu.VMEM((tm, tn), jnp.float32)],
        ),
        compiler_params=pltpu.CompilerParams(
            dimension_semantics=("parallel", "parallel", "arbitrary"),
            vmem_limit_bytes=int(vmem_limit_bytes),
        ),
        cost_estimate=cost,
    )(x2d, w1, b1, w2, b2)

    return out2d[:N].reshape(B, S, dim_out)


# ---------------------------------------------------------------------------
# Parameter init (PyTorch nn.Linear-like, transposed to (in, out)) + reference.
# ---------------------------------------------------------------------------
def init_params(key, dim, dim_out, mult=4, dtype=jnp.float32):
    inner = int(dim * mult)
    dim_out = dim_out or dim
    k1, k2, k3, k4 = jax.random.split(key, 4)
    bound1 = 1.0 / (dim ** 0.5)
    bound2 = 1.0 / (inner ** 0.5)
    w1 = jax.random.uniform(k1, (dim, inner), dtype, -bound1, bound1)
    b1 = jax.random.uniform(k2, (1, inner), dtype, -bound1, bound1)
    w2 = jax.random.uniform(k3, (inner, dim_out), dtype, -bound2, bound2)
    b2 = jax.random.uniform(k4, (1, dim_out), dtype, -bound2, bound2)
    return w1, b1, w2, b2


def feedforward_ref(x, w1, b1, w2, b2):
    h = x @ w1 + b1[0]
    h = h * jax.nn.sigmoid(h)
    return h @ w2 + b2[0]


if __name__ == "__main__":
    # Small shapes consistent with forward(x: (batch, seq, dim)).
    B, S, dim, mult = 2, 8, 128, 4          # inner = 512, dim_out = dim = 128
    key = jax.random.PRNGKey(0)
    kx, kp = jax.random.split(key)
    x = jax.random.normal(kx, (B, S, dim), jnp.float32)
    w1, b1, w2, b2 = init_params(kp, dim, None, mult)
    ref = feedforward_ref(x.reshape(-1, dim), w1, b1, w2, b2).reshape(B, S, -1)

    # 1) Default budget-driven tiling: weights fit -> resident (num_k == 1).
    out = jax.block_until_ready(feedforward_pallas(x, w1, b1, w2, b2))
    assert out.shape == (B, S, dim)
    assert jnp.allclose(out, ref, atol=1e-4, rtol=1e-4), "mismatch (resident weights)"

    # 2) Forced multi-step grid on rows + k: exercises padding, pipelining and
    #    the k-axis accumulator (init / accumulate / finalize) path.
    out_t = jax.block_until_ready(
        feedforward_pallas(x, w1, b1, w2, b2, row_tile=8, inner_tile=128))
    assert jnp.allclose(out_t, ref, atol=1e-4, rtol=1e-4), "mismatch (k-tiled grid)"

    # 3) dim_out > dim with a forced out-column split (megacore decode path).
    dim_out = 256
    w1b, b1b, w2b, b2b = init_params(jax.random.PRNGKey(1), dim, dim_out, mult)
    ref2 = feedforward_ref(x.reshape(-1, dim), w1b, b1b, w2b, b2b).reshape(B, S, -1)
    out2 = jax.block_until_ready(
        feedforward_pallas(x, w1b, b1b, w2b, b2b, out_tile=128))
    assert out2.shape == (B, S, dim_out)
    assert jnp.allclose(out2, ref2, atol=1e-4, rtol=1e-4), "mismatch (out-column split)"

    # 4) bf16 datapath (v6e/v7x MXU rate; f32 accumulation inside the kernel).
    xb = x.astype(jnp.bfloat16)
    w1h, b1h, w2h, b2h = (a.astype(jnp.bfloat16) for a in (w1, b1, w2, b2))
    out_bf = jax.block_until_ready(feedforward_pallas(xb, w1h, b1h, w2h, b2h))
    assert out_bf.dtype == jnp.bfloat16
    assert jnp.allclose(out_bf.astype(jnp.float32), ref, atol=5e-2, rtol=5e-2), \
        "mismatch (bf16 datapath)"

    print("KERNEL_OK")
</pallas_src>

<mosaic_0001>
module attributes {stable_mosaic.version = 11 : i64} {
  func.func @_ff_kernel(%arg0: i32, %arg1: i32, %arg2: i32, %arg3: memref<16x128xf32, #tpu.memory_space<vmem>>, %arg4: memref<128x512xf32, #tpu.memory_space<vmem>>, %arg5: memref<1x512xf32, #tpu.memory_space<vmem>>, %arg6: memref<512x128xf32, #tpu.memory_space<vmem>>, %arg7: memref<1x128xf32, #tpu.memory_space<vmem>>, %arg8: memref<16x128xf32, #tpu.memory_space<vmem>>, %arg9: memref<16x128xf32, #tpu.memory_space<vmem>>) attributes {dimension_semantics = [#tpu.dimension_semantics<parallel>, #tpu.dimension_semantics<parallel>, #tpu.dimension_semantics<arbitrary>], iteration_bounds = array<i64: 1, 1, 1>, scalar_prefetch = 0 : i64, scratch_operands = 1 : i64, tpu.core_type = #tpu.core_type<tc>, window_params = [{transform_indices = @transform_0, window_bounds = array<i64: 16, 128>}, {pipeline_mode = #tpu.pipeline_mode<synchronous>, transform_indices = @transform_1, window_bounds = array<i64: 128, 512>}, {pipeline_mode = #tpu.pipeline_mode<synchronous>, transform_indices = @transform_2, window_bounds = array<i64: 1, 512>}, {pipeline_mode = #tpu.pipeline_mode<synchronous>, transform_indices = @transform_3, window_bounds = array<i64: 512, 128>}, {pipeline_mode = #tpu.pipeline_mode<synchronous>, transform_indices = @transform_4, window_bounds = array<i64: 1, 128>}, {transform_indices = @transform_5, window_bounds = array<i64: 16, 128>}]} {
    %c0_i32 = arith.constant 0 : i32
    %0 = arith.cmpi eq, %arg2, %c0_i32 : i32
    %1 = arith.extui %0 : i1 to i32
    %c0_i32_0 = arith.constant 0 : i32
    %2 = arith.cmpi ne, %1, %c0_i32_0 : i32
    scf.if %2 {
      %cst_16 = arith.constant 0.000000e+00 : f32
      %23 = vector.broadcast %cst_16 : f32 to vector<16x128xf32>
      %c0_17 = arith.constant 0 : index
      %c0_18 = arith.constant 0 : index
      %24 = vector.load %arg9[%c0_17, %c0_18] : memref<16x128xf32, #tpu.memory_space<vmem>>, vector<16x128xf32>
      tpu.vector_store %arg9[%c0_17, %c0_18], %23 {strides = array<i32>} : memref<16x128xf32, #tpu.memory_space<vmem>>, vector<16x128xf32>,
    } else {
    }
    %c0 = arith.constant 0 : index
    %c0_1 = arith.constant 0 : index
    %3 = vector.load %arg3[%c0, %c0_1] : memref<16x128xf32, #tpu.memory_space<vmem>>, vector<16x128xf32>
    %c0_2 = arith.constant 0 : index
    %c0_3 = arith.constant 0 : index
    %4 = vector.load %arg4[%c0_2, %c0_3] : memref<128x512xf32, #tpu.memory_space<vmem>>, vector<128x512xf32>
    %cst = arith.constant dense<0.000000e+00> : vector<16x512xf32>
    %5 = tpu.matmul %3, %4, %cst {dimension_numbers = #tpu.dot_dimension_numbers<[1], [0], [0], [1], [0, 0, 1, 1], [], []>} : vector<16x128xf32>, vector<128x512xf32>, vector<16x512xf32> -> vector<16x512xf32>
    %c0_4 = arith.constant 0 : index
    %c0_5 = arith.constant 0 : index
    %6 = vector.load %arg5[%c0_4, %c0_5] : memref<1x512xf32, #tpu.memory_space<vmem>>, vector<1x512xf32>
    %7 = vector.broadcast %6 : vector<1x512xf32> to vector<16x512xf32>
    %8 = arith.addf %5, %7 : vector<16x512xf32>
    %9 = arith.negf %8 : vector<16x512xf32>
    %10 = math.exp %9 : vector<16x512xf32>
    %cst_6 = arith.constant 1.000000e+00 : f32
    %11 = vector.broadcast %cst_6 : f32 to vector<16x512xf32>
    %12 = arith.addf %11, %10 : vector<16x512xf32>
    %13 = arith.divf %11, %12 : vector<16x512xf32>
    %14 = arith.mulf %8, %13 : vector<16x512xf32>
    %c0_7 = arith.constant 0 : index
    %c0_8 = arith.constant 0 : index
    %15 = vector.load %arg9[%c0_7, %c0_8] : memref<16x128xf32, #tpu.memory_space<vmem>>, vector<16x128xf32>
    %c0_9 = arith.constant 0 : index
    %c0_10 = arith.constant 0 : index
    %16 = vector.load %arg6[%c0_9, %c0_10] : memref<512x128xf32, #tpu.memory_space<vmem>>, vector<512x128xf32>
    %cst_11 = arith.constant dense<0.000000e+00> : vector<16x128xf32>
    %17 = tpu.matmul %14, %16, %cst_11 {dimension_numbers = #tpu.dot_dimension_numbers<[1], [0], [0], [1], [0, 0, 1, 1], [], []>} : vector<16x512xf32>, vector<512x128xf32>, vector<16x128xf32> -> vector<16x128xf32>
    %18 = arith.addf %15, %17 : vector<16x128xf32>
    %c0_12 = arith.constant 0 : index
    %c0_13 = arith.constant 0 : index
    %19 = vector.load %arg9[%c0_12, %c0_13] : memref<16x128xf32, #tpu.memory_space<vmem>>, vector<16x128xf32>
    tpu.vector_store %arg9[%c0_12, %c0_13], %18 {strides = array<i32>} : memref<16x128xf32, #tpu.memory_space<vmem>>, vector<16x128xf32>,
    %c0_i32_14 = arith.constant 0 : i32
    %20 = arith.cmpi eq, %arg2, %c0_i32_14 : i32
    %21 = arith.extui %20 : i1 to i32
    %c0_i32_15 = arith.constant 0 : i32
    %22 = arith.cmpi ne, %21, %c0_i32_15 : i32
    scf.if %22 {
      %c0_16 = arith.constant 0 : index
      %c0_17 = arith.constant 0 : index
      %23 = vector.load %arg9[%c0_16, %c0_17] : memref<16x128xf32, #tpu.memory_space<vmem>>, vector<16x128xf32>
      %c0_18 = arith.constant 0 : index
      %c0_19 = arith.constant 0 : index
      %24 = vector.load %arg7[%c0_18, %c0_19] : memref<1x128xf32, #tpu.memory_space<vmem>>, vector<1x128xf32>
      %25 = vector.broadcast %24 : vector<1x128xf32> to vector<16x128xf32>
      %26 = arith.addf %23, %25 : vector<16x128xf32>
      %c0_20 = arith.constant 0 : index
      %c0_21 = arith.constant 0 : index
      %27 = vector.load %arg8[%c0_20, %c0_21] : memref<16x128xf32, #tpu.memory_space<vmem>>, vector<16x128xf32>
      tpu.vector_store %arg8[%c0_20, %c0_21], %26 {strides = array<i32>} : memref<16x128xf32, #tpu.memory_space<vmem>>, vector<16x128xf32>,
    } else {
    }
    return
  }
  func.func @transform_0(%arg0: i32, %arg1: i32, %arg2: i32) -> (i32, i32) {
    %c0_i32 = arith.constant 0 : i32
    %c0_i32_0 = arith.constant 0 : i32
    return %arg0, %c0_i32 : i32, i32
  }
  func.func @transform_1(%arg0: i32, %arg1: i32, %arg2: i32) -> (i32, i32) {
    %c0_i32 = arith.constant 0 : i32
    %c0_i32_0 = arith.constant 0 : i32
    return %c0_i32, %arg2 : i32, i32
  }
  func.func @transform_2(%arg0: i32, %arg1: i32, %arg2: i32) -> (i32, i32) {
    %c0_i32 = arith.constant 0 : i32
    %c0_i32_0 = arith.constant 0 : i32
    return %c0_i32, %arg2 : i32, i32
  }
  func.func @transform_3(%arg0: i32, %arg1: i32, %arg2: i32) -> (i32, i32) {
    %c0_i32 = arith.constant 0 : i32
    return %arg2, %arg1 : i32, i32
  }
  func.func @transform_4(%arg0: i32, %arg1: i32, %arg2: i32) -> (i32, i32) {
    %c0_i32 = arith.constant 0 : i32
    %c0_i32_0 = arith.constant 0 : i32
    return %c0_i32, %arg1 : i32, i32
  }
  func.func @transform_5(%arg0: i32, %arg1: i32, %arg2: i32) -> (i32, i32) {
    %c0_i32 = arith.constant 0 : i32
    return %arg0, %arg1 : i32, i32
  }
}

</mosaic_0001>

<llo_original>
// kernel: tpu_custom_call.1
$region0: #{tpu_custom_call.1}
  #allocation0 [shape = 'u32[]', space=smem, size = 0x4, offset = 0x4, fixed_abs, tag = 'smem constant byte address 0x4 - core index']
  #allocation1 [shape = 'u32[144,128]{1,0:T(1,128)}', space=vmem, size = 0x12000, scoped, tag = 'internal scratch']
  #allocation2 [shape = 'f32[16,128]{1,0:T(8,128)}', space=vmem, size = 0x2000, scoped, tag = 'scratch operand']
  %s0 = inlined_call_operand.hbm [shape: f32[16,128], index: 0, kind: input, shape index: {}]
  %s1 = inlined_call_operand.hbm [shape: f32[128,512], index: 1, kind: input, shape index: {}]
  %s2 = inlined_call_operand.vmem [shape: f32[1,512], index: 2, kind: input, shape index: {}]
  %s3 = inlined_call_operand.hbm [shape: f32[512,128], index: 3, kind: input, shape index: {}]
  %s4 = inlined_call_operand.vmem [shape: f32[1,128], index: 4, kind: input, shape index: {}]
  %s5 = inlined_call_operand.hbm [shape: f32[16,128], index: 5, kind: output, shape index: {}]
  %s6 = sld [smem:[#allocation0]]
  $region50: #{tpu_custom_call.1} parent=0
    _
  %s8 = ssub.s32 1, %s6
  %s9 = scalar_select 0, %s8, %s6
  $region1: #{tpu_custom_call.1} parent=0
    #allocation3 [shape = 'u8[8192]{0}', space=vmem, size = 0x2000, scoped, tag = 'input window, operand 0, single buffered']
    #allocation4 [shape = 's32[1]{0}', space=sflag, size = 0x4, scoped, tag = 'scoped memory for tpu_custom_call.1']
    #allocation5 [shape = 's32[1]{0}', space=sflag, size = 0x4, scoped, tag = 'scoped memory for tpu_custom_call.1']
    #allocation6 [shape = 'u8[262144]{0}', space=vmem, size = 0x40000, scoped, tag = 'input window, operand 1, single buffered']
    #allocation7 [shape = 's32[1]{0}', space=sflag, size = 0x4, scoped, tag = 'scoped memory for tpu_custom_call.1']
    #allocation8 [shape = 'u8[262144]{0}', space=vmem, size = 0x40000, scoped, tag = 'input window, operand 3, single buffered']
    #allocation9 [shape = 'u8[8192]{0}', space=vmem, size = 0x2000, scoped, tag = 'output window, operand 0, single buffered']
    %10 = vsyncpa [#allocation4], 0
    %11 = vsyncpa [#allocation7], 0
    %12 = vsyncpa [#allocation5], 0
    // Predicated region
    $region2: #{tpu_custom_call.1} parent=1 // pred_check
      _
    $region3: #{tpu_custom_call.1} parent=1 // pred_check_branch
      %14 = sbr.rel (0) target = $region5
    $region4: #{tpu_custom_call.1} parent=1 // pred_region
      %s16 = ssub.s32 256, 256
      %17 = vsyncadd [#allocation4], %s16
      %s18 = sshll.u32 [#allocation3], 4
      %s19 = int_to_ptr.vmem [resolvable:$true] %s18
      %24 = dma.hbm_to_vmem [thread:$0]  %s0, 256, %s19, [#allocation4], 128, 128, 8
    $region5: #{tpu_custom_call.1} parent=1 // pred_fallthru
      _
    // Predicated region
    $region6: #{tpu_custom_call.1} parent=1 // pred_check
      _
    $region7: #{tpu_custom_call.1} parent=1 // pred_check_branch
      %26 = sbr.rel (0) target = $region9
    $region8: #{tpu_custom_call.1} parent=1 // pred_region
      %s28 = ssub.s32 8192, 8192
      %29 = vsyncadd [#allocation7], %s28
      %s30 = sshll.u32 [#allocation6], 4
      %s31 = int_to_ptr.vmem [resolvable:$true] %s30
      %36 = dma.hbm_to_vmem [thread:$0]  %s1, 8192, %s31, [#allocation7], 512, 512, 32
    $region9: #{tpu_custom_call.1} parent=1 // pred_fallthru
      _
    // Predicated region
    $region10: #{tpu_custom_call.1} parent=1 // pred_check
      _
    $region11: #{tpu_custom_call.1} parent=1 // pred_check_branch
      %38 = sbr.rel (0) target = $region13
    $region12: #{tpu_custom_call.1} parent=1 // pred_region
      _
    $region13: #{tpu_custom_call.1} parent=1 // pred_fallthru
      _
    // Predicated region
    $region14: #{tpu_custom_call.1} parent=1 // pred_check
      _
    $region15: #{tpu_custom_call.1} parent=1 // pred_check_branch
      %40 = sbr.rel (0) target = $region17
    $region16: #{tpu_custom_call.1} parent=1 // pred_region
      %s42 = ssub.s32 8192, 8192
      %43 = vsyncadd [#allocation7], %s42
      %s44 = sshll.u32 [#allocation8], 4
      %s45 = int_to_ptr.vmem [resolvable:$true] %s44
      %50 = dma.hbm_to_vmem [thread:$0]  %s3, 8192, %s45, [#allocation7], 128, 128, 8
    $region17: #{tpu_custom_call.1} parent=1 // pred_fallthru
      _
    // Predicated region
    $region18: #{tpu_custom_call.1} parent=1 // pred_check
      _
    $region19: #{tpu_custom_call.1} parent=1 // pred_check_branch
      %52 = sbr.rel (0) target = $region21
    $region20: #{tpu_custom_call.1} parent=1 // pred_region
      _
    $region21: #{tpu_custom_call.1} parent=1 // pred_fallthru
      _
    // Predicated region
    $region22: #{tpu_custom_call.1} parent=1 // pred_check
      _
    $region23: #{tpu_custom_call.1} parent=1 // pred_check_branch
      %54 = sbr.rel (0) target = $region25
    $region24: #{tpu_custom_call.1} parent=1 // pred_region
      %55 = dma.done [#allocation4], 256
    $region25: #{tpu_custom_call.1} parent=1 // pred_fallthru
      _
    // Predicated region
    $region26: #{tpu_custom_call.1} parent=1 // pred_check
      _
    $region27: #{tpu_custom_call.1} parent=1 // pred_check_branch
      %57 = sbr.rel (0) target = $region29
    $region28: #{tpu_custom_call.1} parent=1 // pred_region
      %58 = dma.done [#allocation7], 8192
    $region29: #{tpu_custom_call.1} parent=1 // pred_fallthru
      _
    // Predicated region
    $region30: #{tpu_custom_call.1} parent=1 // pred_check
      _
    $region31: #{tpu_custom_call.1} parent=1 // pred_check_branch
      %60 = sbr.rel (0) target = $region33
    $region32: #{tpu_custom_call.1} parent=1 // pred_region
      %61 = dma.done [#allocation7], 8192
    $region33: #{tpu_custom_call.1} parent=1 // pred_fallthru
      _
    %p62 = scmp.eq.s32.totalorder 0, 0
    // Predicated region
    $region34: #{tpu_custom_call.1} parent=1 // pred_check
      %p63 = pneg %p62
    $region35: #{tpu_custom_call.1} parent=1 // pred_check_branch
      %65 = sbr.rel (%p63) target = $region37
    $region36: #{tpu_custom_call.1} parent=1 // pred_region
      %66 = vst [vmem:[#allocation2] sm:$0xff] 0.0
      %67 = vst [vmem:[#allocation2 + $0x8] sm:$0xff] 0.0
    $region37: #{tpu_custom_call.1} parent=1 // pred_fallthru
      _
    %v68 = vld [vmem:[#allocation3] sm:$0xff]
    %v69 = vld [vmem:[#allocation3 + $0x8] sm:$0xff]
    %v70 = vld [vmem:[#allocation6] sm:$0xff]
    %v71 = vld [vmem:[#allocation6 + $0x8] sm:$0xff]
    %v72 = vld [vmem:[#allocation6 + $0x10] sm:$0xff]
    %v73 = vld [vmem:[#allocation6 + $0x18] sm:$0xff]
    %v74 = vld [vmem:[#allocation6 + $0x20] sm:$0xff]
    %v75 = vld [vmem:[#allocation6 + $0x28] sm:$0xff]
    %v76 = vld [vmem:[#allocation6 + $0x30] sm:$0xff]
    %v77 = vld [vmem:[#allocation6 + $0x38] sm:$0xff]
    %v78 = vld [vmem:[#allocation6 + $0x40] sm:$0xff]
    %v79 = vld [vmem:[#allocation6 + $0x48] sm:$0xff]
    %v80 = vld [vmem:[#allocation6 + $0x50] sm:$0xff]
    %v81 = vld [vmem:[#allocation6 + $0x58] sm:$0xff]
    %v82 = vld [vmem:[#allocation6 + $0x60] sm:$0xff]
    %v83 = vld [vmem:[#allocation6 + $0x68] sm:$0xff]
    %v84 = vld [vmem:[#allocation6 + $0x70] sm:$0xff]
    %v85 = vld [vmem:[#allocation6 + $0x78] sm:$0xff]
    %v86 = vld [vmem:[#allocation6 + $0x80] sm:$0xff]
    %v87 = vld [vmem:[#allocation6 + $0x88] sm:$0xff]
    %v88 = vld [vmem:[#allocation6 + $0x90] sm:$0xff]
    %v89 = vld [vmem:[#allocation6 + $0x98] sm:$0xff]
    %v90 = vld [vmem:[#allocation6 + $0xa0] sm:$0xff]
    %v91 = vld [vmem:[#allocation6 + $0xa8] sm:$0xff]
    %v92 = vld [vmem:[#allocation6 + $0xb0] sm:$0xff]
    %v93 = vld [vmem:[#allocation6 + $0xb8] sm:$0xff]
    %v94 = vld [vmem:[#allocation6 + $0xc0] sm:$0xff]
    %v95 = vld [vmem:[#allocation6 + $0xc8] sm:$0xff]
    %v96 = vld [vmem:[#allocation6 + $0xd0] sm:$0xff]
    %v97 = vld [vmem:[#allocation6 + $0xd8] sm:$0xff]
    %v98 = vld [vmem:[#allocation6 + $0xe0] sm:$0xff]
    %v99 = vld [vmem:[#allocation6 + $0xe8] sm:$0xff]
    %v100 = vld [vmem:[#allocation6 + $0xf0] sm:$0xff]
    %v101 = vld [vmem:[#allocation6 + $0xf8] sm:$0xff]
    %v102 = vld [vmem:[#allocation6 + $0x100] sm:$0xff]
    %v103 = vld [vmem:[#allocation6 + $0x108] sm:$0xff]
    %v104 = vld [vmem:[#allocation6 + $0x110] sm:$0xff]
    %v105 = vld [vmem:[#allocation6 + $0x118] sm:$0xff]
    %v106 = vld [vmem:[#allocation6 + $0x120] sm:$0xff]
    %v107 = vld [vmem:[#allocation6 + $0x128] sm:$0xff]
    %v108 = vld [vmem:[#allocation6 + $0x130] sm:$0xff]
    %v109 = vld [vmem:[#allocation6 + $0x138] sm:$0xff]
    %v110 = vld [vmem:[#allocation6 + $0x140] sm:$0xff]
    %v111 = vld [vmem:[#allocation6 + $0x148] sm:$0xff]
    %v112 = vld [vmem:[#allocation6 + $0x150] sm:$0xff]
    %v113 = vld [vmem:[#allocation6 + $0x158] sm:$0xff]
    %v114 = vld [vmem:[#allocation6 + $0x160] sm:$0xff]
    %v115 = vld [vmem:[#allocation6 + $0x168] sm:$0xff]
    %v116 = vld [vmem:[#allocation6 + $0x170] sm:$0xff]
    %v117 = vld [vmem:[#allocation6 + $0x178] sm:$0xff]
    %v118 = vld [vmem:[#allocation6 + $0x180] sm:$0xff]
    %v119 = vld [vmem:[#allocation6 + $0x188] sm:$0xff]
    %v120 = vld [vmem:[#allocation6 + $0x190] sm:$0xff]
    %v121 = vld [vmem:[#allocation6 + $0x198] sm:$0xff]
    %v122 = vld [vmem:[#allocation6 + $0x1a0] sm:$0xff]
    %v123 = vld [vmem:[#allocation6 + $0x1a8] sm:$0xff]
    %v124 = vld [vmem:[#allocation6 + $0x1b0] sm:$0xff]
    %v125 = vld [vmem:[#allocation6 + $0x1b8] sm:$0xff]
    %v126 = vld [vmem:[#allocation6 + $0x1c0] sm:$0xff]
    %v127 = vld [vmem:[#allocation6 + $0x1c8] sm:$0xff]
    %v128 = vld [vmem:[#allocation6 + $0x1d0] sm:$0xff]
    %v129 = vld [vmem:[#allocation6 + $0x1d8] sm:$0xff]
    %v130 = vld [vmem:[#allocation6 + $0x1e0] sm:$0xff]
    %v131 = vld [vmem:[#allocation6 + $0x1e8] sm:$0xff]
    %v132 = vld [vmem:[#allocation6 + $0x1f0] sm:$0xff]
    %v133 = vld [vmem:[#allocation6 + $0x1f8] sm:$0xff]
    %v134 = vld [vmem:[%s2] sm:$0xf]
    %v136 = vlaneseq
    %v137 = vshrl.u32 %v136, 7
    %v138 = vsub.s32 0, %v137
    %v139 = vrot.slane %v134, %v138
    %v140 = vlaneseq
    %v141 = vshrl.u32 %v140, 7
    %v142 = vsub.s32 1, %v141
    %v143 = vrot.slane %v134, %v142
    %v144 = vlaneseq
    %v145 = vshrl.u32 %v144, 7
    %v146 = vsub.s32 2, %v145
    %v147 = vrot.slane %v134, %v146
    %v148 = vlaneseq
    %v149 = vshrl.u32 %v148, 7
    %v150 = vsub.s32 3, %v149
    %v151 = vrot.slane %v134, %v150
    %156 = vmatprep.subr.mxu0 %v71
    %157 = vmatpush1.msra.mxu0 %v70
    %158 = vmatprep.subr.mxu0 %v75
    %159 = vmatpush1.msra.mxu0 %v74
    %160 = vmatprep.subr.mxu0 %v79
    %161 = vmatpush1.msra.mxu0 %v78
    %162 = vmatprep.subr.mxu0 %v83
    %163 = vmatpush1.msra.mxu0 %v82
    %164 = vmatprep.subr.mxu0 %v87
    %165 = vmatpush1.msra.mxu0 %v86
    %166 = vmatprep.subr.mxu0 %v91
    %167 = vmatpush1.msra.mxu0 %v90
    %168 = vmatprep.subr.mxu0 %v95
    %169 = vmatpush1.msra.mxu0 %v94
    %170 = vmatprep.subr.mxu0 %v99
    %171 = vmatpush1.msra.mxu0 %v98
    %172 = vmatprep.subr.mxu0 %v103
    %173 = vmatpush1.msra.mxu0 %v102
    %174 = vmatprep.subr.mxu0 %v107
    %175 = vmatpush1.msra.mxu0 %v106
    %176 = vmatprep.subr.mxu0 %v111
    %177 = vmatpush1.msra.mxu0 %v110
    %178 = vmatprep.subr.mxu0 %v115
    %179 = vmatpush1.msra.mxu0 %v114
    %180 = vmatprep.subr.mxu0 %v119
    %181 = vmatpush1.msra.mxu0 %v118
    %182 = vmatprep.subr.mxu0 %v123
    %183 = vmatpush1.msra.mxu0 %v122
    %184 = vmatprep.subr.mxu0 %v127
    %185 = vmatpush1.msra.mxu0 %v126
    %186 = vmatprep.subr.mxu0 %v131
    %187 = vmatpush1.msra.mxu0 %v130
    %188 = vmatprep.subr.mxu0 0.0
    %189 = vmatpush1.msra.mxu0 0.0
    %190 = vmatprep.subr.mxu0 0.0
    %191 = vmatpush1.msra.mxu0 0.0
    %192 = vmatprep.subr.mxu0 0.0
    %193 = vmatpush1.msra.mxu0 0.0
    %194 = vmatprep.subr.mxu0 0.0
    %195 = vmatpush1.msra.mxu0 0.0
    %196 = vmatprep.subr.mxu0 0.0
    %197 = vmatpush1.msra.mxu0 0.0
    %198 = vmatprep.subr.mxu0 0.0
    %199 = vmatpush1.msra.mxu0 0.0
    %200 = vmatprep.subr.mxu0 0.0
    %201 = vmatpush1.msra.mxu0 0.0
    %202 = vmatprep.subr.mxu0 0.0
    %203 = vmatpush1.msra.mxu0 0.0
    %204 = vmatprep.subr.mxu0 0.0
    %205 = vmatpush1.msra.mxu0 0.0
    %206 = vmatprep.subr.mxu0 0.0
    %207 = vmatpush1.msra.mxu0 0.0
    %208 = vmatprep.subr.mxu0 0.0
    %209 = vmatpush1.msra.mxu0 0.0
    %210 = vmatprep.subr.mxu0 0.0
    %211 = vmatpush1.msra.mxu0 0.0
    %212 = vmatprep.subr.mxu0 0.0
    %213 = vmatpush1.msra.mxu0 0.0
    %214 = vmatprep.subr.mxu0 0.0
    %215 = vmatpush1.msra.mxu0 0.0
    %216 = vmatprep.subr.mxu0 0.0
    %217 = vmatpush1.msra.mxu0 0.0
    %218 = vmatprep.subr.mxu0 0.0
    %219 = vmatpush1.msra.mxu0 0.0
    %220 = vmatprep.mubr.f32.mxu0 0.0
    %221 = vmatmul.mubr.f32.gmra.mrb[0].mxu0 %v68
    %v222 = vpop.f32.mrb[0].mxu0
    %v223 = vadd.f32 %v139, %v222
    %v224 = vpop.f32.mrb[0].mxu0
    %v225 = vadd.f32 %v143, %v224
    %226 = vmatprep.mubr.f32.mxu0 0.0
    %227 = vmatmul.mubr.f32.gmra.mrb[0].mxu0 %v69
    %v228 = vpop.f32.mrb[0].mxu0
    %v229 = vadd.f32 %v139, %v228
    %v230 = vpop.f32.mrb[0].mxu0
    %v231 = vadd.f32 %v143, %v230
    %232 = vdwg.mxu0
    %233 = vmatprep.subr.mxu0 %v73
    %234 = vmatpush1.msra.mxu0 %v72
    %235 = vmatprep.subr.mxu0 %v77
    %236 = vmatpush1.msra.mxu0 %v76
    %237 = vmatprep.subr.mxu0 %v81
    %238 = vmatpush1.msra.mxu0 %v80
    %239 = vmatprep.subr.mxu0 %v85
    %240 = vmatpush1.msra.mxu0 %v84
    %241 = vmatprep.subr.mxu0 %v89
    %242 = vmatpush1.msra.mxu0 %v88
    %243 = vmatprep.subr.mxu0 %v93
    %244 = vmatpush1.msra.mxu0 %v92
    %245 = vmatprep.subr.mxu0 %v97
    %246 = vmatpush1.msra.mxu0 %v96
    %247 = vmatprep.subr.mxu0 %v101
    %248 = vmatpush1.msra.mxu0 %v100
    %249 = vmatprep.subr.mxu0 %v105
    %250 = vmatpush1.msra.mxu0 %v104
    %251 = vmatprep.subr.mxu0 %v109
    %252 = vmatpush1.msra.mxu0 %v108
    %253 = vmatprep.subr.mxu0 %v113
    %254 = vmatpush1.msra.mxu0 %v112
    %255 = vmatprep.subr.mxu0 %v117
    %256 = vmatpush1.msra.mxu0 %v116
    %257 = vmatprep.subr.mxu0 %v121
    %258 = vmatpush1.msra.mxu0 %v120
    %259 = vmatprep.subr.mxu0 %v125
    %260 = vmatpush1.msra.mxu0 %v124
    %261 = vmatprep.subr.mxu0 %v129
    %262 = vmatpush1.msra.mxu0 %v128
    %263 = vmatprep.subr.mxu0 %v133
    %264 = vmatpush1.msra.mxu0 %v132
    %265 = vmatprep.subr.mxu0 0.0
    %266 = vmatpush1.msra.mxu0 0.0
    %267 = vmatprep.subr.mxu0 0.0
    %268 = vmatpush1.msra.mxu0 0.0
    %269 = vmatprep.subr.mxu0 0.0
    %270 = vmatpush1.msra.mxu0 0.0
    %271 = vmatprep.subr.mxu0 0.0
    %272 = vmatpush1.msra.mxu0 0.0
    %273 = vmatprep.subr.mxu0 0.0
    %274 = vmatpush1.msra.mxu0 0.0
    %275 = vmatprep.subr.mxu0 0.0
    %276 = vmatpush1.msra.mxu0 0.0
    %277 = vmatprep.subr.mxu0 0.0
    %278 = vmatpush1.msra.mxu0 0.0
    %279 = vmatprep.subr.mxu0 0.0
    %280 = vmatpush1.msra.mxu0 0.0
    %281 = vmatprep.subr.mxu0 0.0
    %282 = vmatpush1.msra.mxu0 0.0
    %283 = vmatprep.subr.mxu0 0.0
    %284 = vmatpush1.msra.mxu0 0.0
    %285 = vmatprep.subr.mxu0 0.0
    %286 = vmatpush1.msra.mxu0 0.0
    %287 = vmatprep.subr.mxu0 0.0
    %288 = vmatpush1.msra.mxu0 0.0
    %289 = vmatprep.subr.mxu0 0.0
    %290 = vmatpush1.msra.mxu0 0.0
    %291 = vmatprep.subr.mxu0 0.0
    %292 = vmatpush1.msra.mxu0 0.0
    %293 = vmatprep.subr.mxu0 0.0
    %294 = vmatpush1.msra.mxu0 0.0
    %295 = vmatprep.subr.mxu0 0.0
    %296 = vmatpush1.msra.mxu0 0.0
    %297 = vmatprep.mubr.f32.mxu0 0.0
    %298 = vmatmul.mubr.f32.gmra.mrb[0].mxu0 %v68
    %v299 = vpop.f32.mrb[0].mxu0
    %v300 = vadd.f32 %v147, %v299
    %v301 = vpop.f32.mrb[0].mxu0
    %v302 = vadd.f32 %v151, %v301
    %303 = vmatprep.mubr.f32.mxu0 0.0
    %304 = vmatmul.mubr.f32.gmra.mrb[0].mxu0 %v69
    %v305 = vpop.f32.mrb[0].mxu0
    %v306 = vadd.f32 %v147, %v305
    %v307 = vpop.f32.mrb[0].mxu0
    %v308 = vadd.f32 %v151, %v307
    %309 = vdwg.mxu0
    %v310 = vxor.u32 %v223, 2147483648
    %v311 = vxor.u32 %v225, 2147483648
    %v312 = vxor.u32 %v300, 2147483648
    %v313 = vxor.u32 %v302, 2147483648
    %v314 = vxor.u32 %v229, 2147483648
    %v315 = vxor.u32 %v231, 2147483648
    %v316 = vxor.u32 %v306, 2147483648
    %v317 = vxor.u32 %v308, 2147483648
    %v318 = vmul.f32 %v310, 1.442695
    %v319 = vpow.pop %v318
    %v320 = vmul.f32 %v311, 1.442695
    %v321 = vpow.pop %v320
    %v322 = vmul.f32 %v312, 1.442695
    %v323 = vpow.pop %v322
    %v324 = vmul.f32 %v313, 1.442695
    %v325 = vpow.pop %v324
    %v326 = vmul.f32 %v314, 1.442695
    %v327 = vpow.pop %v326
    %v328 = vmul.f32 %v315, 1.442695
    %v329 = vpow.pop %v328
    %v330 = vmul.f32 %v316, 1.442695
    %v331 = vpow.pop %v330
    %v332 = vmul.f32 %v317, 1.442695
    %v333 = vpow.pop %v332
    %v334 = vadd.f32 %v319, 1.0
    %v335 = vadd.f32 %v321, 1.0
    %v336 = vadd.f32 %v323, 1.0
    %v337 = vadd.f32 %v325, 1.0
    %v338 = vadd.f32 %v327, 1.0
    %v339 = vadd.f32 %v329, 1.0
    %v340 = vadd.f32 %v331, 1.0
    %v341 = vadd.f32 %v333, 1.0
    %v342 = vrcp.pop %v334
    %v343 = vmul.f32 1.0, %v342
    %v344 = vrcp.pop %v335
    %v345 = vmul.f32 1.0, %v344
    %v346 = vrcp.pop %v336
    %v347 = vmul.f32 1.0, %v346
    %v348 = vrcp.pop %v337
    %v349 = vmul.f32 1.0, %v348
    %v350 = vrcp.pop %v338
    %v351 = vmul.f32 1.0, %v350
    %v352 = vrcp.pop %v339
    %v353 = vmul.f32 1.0, %v352
    %v354 = vrcp.pop %v340
    %v355 = vmul.f32 1.0, %v354
    %v356 = vrcp.pop %v341
    %v357 = vmul.f32 1.0, %v356
    %v358 = vmul.f32 %v223, %v343
    %v359 = vmul.f32 %v225, %v345
    %v360 = vmul.f32 %v300, %v347
    %v361 = vmul.f32 %v302, %v349
    %v362 = vmul.f32 %v229, %v351
    %v363 = vmul.f32 %v231, %v353
    %v364 = vmul.f32 %v306, %v355
    %v365 = vmul.f32 %v308, %v357
    %v366 = vld [vmem:[#allocation2] sm:$0xff]
    %v367 = vld [vmem:[#allocation2 + $0x8] sm:$0xff]
    %v368 = vld [vmem:[#allocation8] sm:$0xff]
    %v369 = vld [vmem:[#allocation8 + $0x8] sm:$0xff]
    %v370 = vld [vmem:[#allocation8 + $0x10] sm:$0xff]
    %v371 = vld [vmem:[#allocation8 + $0x18] sm:$0xff]
    %v372 = vld [vmem:[#allocation8 + $0x20] sm:$0xff]
    %v373 = vld [vmem:[#allocation8 + $0x28] sm:$0xff]
    %v374 = vld [vmem:[#allocation8 + $0x30] sm:$0xff]
    %v375 = vld [vmem:[#allocation8 + $0x38] sm:$0xff]
    %v376 = vld [vmem:[#allocation8 + $0x40] sm:$0xff]
    %v377 = vld [vmem:[#allocation8 + $0x48] sm:$0xff]
    %v378 = vld [vmem:[#allocation8 + $0x50] sm:$0xff]
    %v379 = vld [vmem:[#allocation8 + $0x58] sm:$0xff]
    %v380 = vld [vmem:[#allocation8 + $0x60] sm:$0xff]
    %v381 = vld [vmem:[#allocation8 + $0x68] sm:$0xff]
    %v382 = vld [vmem:[#allocation8 + $0x70] sm:$0xff]
    %v383 = vld [vmem:[#allocation8 + $0x78] sm:$0xff]
    %v384 = vld [vmem:[#allocation8 + $0x80] sm:$0xff]
    %v385 = vld [vmem:[#allocation8 + $0x88] sm:$0xff]
    %v386 = vld [vmem:[#allocation8 + $0x90] sm:$0xff]
    %v387 = vld [vmem:[#allocation8 + $0x98] sm:$0xff]
    %v388 = vld [vmem:[#allocation8 + $0xa0] sm:$0xff]
    %v389 = vld [vmem:[#allocation8 + $0xa8] sm:$0xff]
    %v390 = vld [vmem:[#allocation8 + $0xb0] sm:$0xff]
    %v391 = vld [vmem:[#allocation8 + $0xb8] sm:$0xff]
    %v392 = vld [vmem:[#allocation8 + $0xc0] sm:$0xff]
    %v393 = vld [vmem:[#allocation8 + $0xc8] sm:$0xff]
    %v394 = vld [vmem:[#allocation8 + $0xd0] sm:$0xff]
    %v395 = vld [vmem:[#allocation8 + $0xd8] sm:$0xff]
    %v396 = vld [vmem:[#allocation8 + $0xe0] sm:$0xff]
    %v397 = vld [vmem:[#allocation8 + $0xe8] sm:$0xff]
    %v398 = vld [vmem:[#allocation8 + $0xf0] sm:$0xff]
    %v399 = vld [vmem:[#allocation8 + $0xf8] sm:$0xff]
    %v400 = vld [vmem:[#allocation8 + $0x100] sm:$0xff]
    %v401 = vld [vmem:[#allocation8 + $0x108] sm:$0xff]
    %v402 = vld [vmem:[#allocation8 + $0x110] sm:$0xff]
    %v403 = vld [vmem:[#allocation8 + $0x118] sm:$0xff]
    %v404 = vld [vmem:[#allocation8 + $0x120] sm:$0xff]
    %v405 = vld [vmem:[#allocation8 + $0x128] sm:$0xff]
    %v406 = vld [vmem:[#allocation8 + $0x130] sm:$0xff]
    %v407 = vld [vmem:[#allocation8 + $0x138] sm:$0xff]
    %v408 = vld [vmem:[#allocation8 + $0x140] sm:$0xff]
    %v409 = vld [vmem:[#allocation8 + $0x148] sm:$0xff]
    %v410 = vld [vmem:[#allocation8 + $0x150] sm:$0xff]
    %v411 = vld [vmem:[#allocation8 + $0x158] sm:$0xff]
    %v412 = vld [vmem:[#allocation8 + $0x160] sm:$0xff]
    %v413 = vld [vmem:[#allocation8 + $0x168] sm:$0xff]
    %v414 = vld [vmem:[#allocation8 + $0x170] sm:$0xff]
    %v415 = vld [vmem:[#allocation8 + $0x178] sm:$0xff]
    %v416 = vld [vmem:[#allocation8 + $0x180] sm:$0xff]
    %v417 = vld [vmem:[#allocation8 + $0x188] sm:$0xff]
    %v418 = vld [vmem:[#allocation8 + $0x190] sm:$0xff]
    %v419 = vld [vmem:[#allocation8 + $0x198] sm:$0xff]
    %v420 = vld [vmem:[#allocation8 + $0x1a0] sm:$0xff]
    %v421 = vld [vmem:[#allocation8 + $0x1a8] sm:$0xff]
    %v422 = vld [vmem:[#allocation8 + $0x1b0] sm:$0xff]
    %v423 = vld [vmem:[#allocation8 + $0x1b8] sm:$0xff]
    %v424 = vld [vmem:[#allocation8 + $0x1c0] sm:$0xff]
    %v425 = vld [vmem:[#allocation8 + $0x1c8] sm:$0xff]
    %v426 = vld [vmem:[#allocation8 + $0x1d0] sm:$0xff]
    %v427 = vld [vmem:[#allocation8 + $0x1d8] sm:$0xff]
    %v428 = vld [vmem:[#allocation8 + $0x1e0] sm:$0xff]
    %v429 = vld [vmem:[#allocation8 + $0x1e8] sm:$0xff]
    %v430 = vld [vmem:[#allocation8 + $0x1f0] sm:$0xff]
    %v431 = vld [vmem:[#allocation8 + $0x1f8] sm:$0xff]
    %432 = vmatprep.subr.mxu0 0.0
    %433 = vmatpush1.msra.mxu0 %v368
    %434 = vmatprep.subr.mxu0 0.0
    %435 = vmatpush1.msra.mxu0 %v369
    %436 = vmatprep.subr.mxu0 0.0
    %437 = vmatpush1.msra.mxu0 %v370
    %438 = vmatprep.subr.mxu0 0.0
    %439 = vmatpush1.msra.mxu0 %v371
    %440 = vmatprep.subr.mxu0 0.0
    %441 = vmatpush1.msra.mxu0 %v372
    %442 = vmatprep.subr.mxu0 0.0
    %443 = vmatpush1.msra.mxu0 %v373
    %444 = vmatprep.subr.mxu0 0.0
    %445 = vmatpush1.msra.mxu0 %v374
    %446 = vmatprep.subr.mxu0 0.0
    %447 = vmatpush1.msra.mxu0 %v375
    %448 = vmatprep.subr.mxu0 0.0
    %449 = vmatpush1.msra.mxu0 %v376
    %450 = vmatprep.subr.mxu0 0.0
    %451 = vmatpush1.msra.mxu0 %v377
    %452 = vmatprep.subr.mxu0 0.0
    %453 = vmatpush1.msra.mxu0 %v378
    %454 = vmatprep.subr.mxu0 0.0
    %455 = vmatpush1.msra.mxu0 %v379
    %456 = vmatprep.subr.mxu0 0.0
    %457 = vmatpush1.msra.mxu0 %v380
    %458 = vmatprep.subr.mxu0 0.0
    %459 = vmatpush1.msra.mxu0 %v381
    %460 = vmatprep.subr.mxu0 0.0
    %461 = vmatpush1.msra.mxu0 %v382
    %462 = vmatprep.subr.mxu0 0.0
    %463 = vmatpush1.msra.mxu0 %v383
    %464 = vmatprep.subr.mxu0 0.0
    %465 = vmatpush1.msra.mxu0 %v384
    %466 = vmatprep.subr.mxu0 0.0
    %467 = vmatpush1.msra.mxu0 %v385
    %468 = vmatprep.subr.mxu0 0.0
    %469 = vmatpush1.msra.mxu0 %v386
    %470 = vmatprep.subr.mxu0 0.0
    %471 = vmatpush1.msra.mxu0 %v387
    %472 = vmatprep.subr.mxu0 0.0
    %473 = vmatpush1.msra.mxu0 %v388
    %474 = vmatprep.subr.mxu0 0.0
    %475 = vmatpush1.msra.mxu0 %v389
    %476 = vmatprep.subr.mxu0 0.0
    %477 = vmatpush1.msra.mxu0 %v390
    %478 = vmatprep.subr.mxu0 0.0
    %479 = vmatpush1.msra.mxu0 %v391
    %480 = vmatprep.subr.mxu0 0.0
    %481 = vmatpush1.msra.mxu0 %v392
    %482 = vmatprep.subr.mxu0 0.0
    %483 = vmatpush1.msra.mxu0 %v393
    %484 = vmatprep.subr.mxu0 0.0
    %485 = vmatpush1.msra.mxu0 %v394
    %486 = vmatprep.subr.mxu0 0.0
    %487 = vmatpush1.msra.mxu0 %v395
    %488 = vmatprep.subr.mxu0 0.0
    %489 = vmatpush1.msra.mxu0 %v396
    %490 = vmatprep.subr.mxu0 0.0
    %491 = vmatpush1.msra.mxu0 %v397
    %492 = vmatprep.subr.mxu0 0.0
    %493 = vmatpush1.msra.mxu0 %v398
    %494 = vmatprep.subr.mxu0 0.0
    %495 = vmatpush1.msra.mxu0 %v399
    %496 = vmatprep.mubr.f32.mxu0 %v359
    %497 = vmatmul.mubr.f32.gmra.mrb[0].mxu0 %v358
    %v498 = vpop.f32.mrb[0].mxu0
    %v499 = vadd.f32 0.0, %v498
    %v500 = vpop.f32.mrb[0].mxu0
    %501 = vmatprep.mubr.f32.mxu0 %v363
    %502 = vmatmul.mubr.f32.gmra.mrb[0].mxu0 %v362
    %v503 = vpop.f32.mrb[0].mxu0
    %v504 = vadd.f32 0.0, %v503
    %v505 = vpop.f32.mrb[0].mxu0
    %506 = vdwg.mxu0
    %507 = vmatprep.subr.mxu0 0.0
    %508 = vmatpush1.msra.mxu0 %v400
    %509 = vmatprep.subr.mxu0 0.0
    %510 = vmatpush1.msra.mxu0 %v401
    %511 = vmatprep.subr.mxu0 0.0
    %512 = vmatpush1.msra.mxu0 %v402
    %513 = vmatprep.subr.mxu0 0.0
    %514 = vmatpush1.msra.mxu0 %v403
    %515 = vmatprep.subr.mxu0 0.0
    %516 = vmatpush1.msra.mxu0 %v404
    %517 = vmatprep.subr.mxu0 0.0
    %518 = vmatpush1.msra.mxu0 %v405
    %519 = vmatprep.subr.mxu0 0.0
    %520 = vmatpush1.msra.mxu0 %v406
    %521 = vmatprep.subr.mxu0 0.0
    %522 = vmatpush1.msra.mxu0 %v407
    %523 = vmatprep.subr.mxu0 0.0
    %524 = vmatpush1.msra.mxu0 %v408
    %525 = vmatprep.subr.mxu0 0.0
    %526 = vmatpush1.msra.mxu0 %v409
    %527 = vmatprep.subr.mxu0 0.0
    %528 = vmatpush1.msra.mxu0 %v410
    %529 = vmatprep.subr.mxu0 0.0
    %530 = vmatpush1.msra.mxu0 %v411
    %531 = vmatprep.subr.mxu0 0.0
    %532 = vmatpush1.msra.mxu0 %v412
    %533 = vmatprep.subr.mxu0 0.0
    %534 = vmatpush1.msra.mxu0 %v413
    %535 = vmatprep.subr.mxu0 0.0
    %536 = vmatpush1.msra.mxu0 %v414
    %537 = vmatprep.subr.mxu0 0.0
    %538 = vmatpush1.msra.mxu0 %v415
    %539 = vmatprep.subr.mxu0 0.0
    %540 = vmatpush1.msra.mxu0 %v416
    %541 = vmatprep.subr.mxu0 0.0
    %542 = vmatpush1.msra.mxu0 %v417
    %543 = vmatprep.subr.mxu0 0.0
    %544 = vmatpush1.msra.mxu0 %v418
    %545 = vmatprep.subr.mxu0 0.0
    %546 = vmatpush1.msra.mxu0 %v419
    %547 = vmatprep.subr.mxu0 0.0
    %548 = vmatpush1.msra.mxu0 %v420
    %549 = vmatprep.subr.mxu0 0.0
    %550 = vmatpush1.msra.mxu0 %v421
    %551 = vmatprep.subr.mxu0 0.0
    %552 = vmatpush1.msra.mxu0 %v422
    %553 = vmatprep.subr.mxu0 0.0
    %554 = vmatpush1.msra.mxu0 %v423
    %555 = vmatprep.subr.mxu0 0.0
    %556 = vmatpush1.msra.mxu0 %v424
    %557 = vmatprep.subr.mxu0 0.0
    %558 = vmatpush1.msra.mxu0 %v425
    %559 = vmatprep.subr.mxu0 0.0
    %560 = vmatpush1.msra.mxu0 %v426
    %561 = vmatprep.subr.mxu0 0.0
    %562 = vmatpush1.msra.mxu0 %v427
    %563 = vmatprep.subr.mxu0 0.0
    %564 = vmatpush1.msra.mxu0 %v428
    %565 = vmatprep.subr.mxu0 0.0
    %566 = vmatpush1.msra.mxu0 %v429
    %567 = vmatprep.subr.mxu0 0.0
    %568 = vmatpush1.msra.mxu0 %v430
    %569 = vmatprep.subr.mxu0 0.0
    %570 = vmatpush1.msra.mxu0 %v431
    %571 = vmatprep.mubr.f32.mxu0 %v361
    %572 = vmatmul.mubr.f32.gmra.mrb[0].mxu0 %v360
    %v573 = vpop.f32.mrb[0].mxu0
    %v574 = vadd.f32 %v499, %v573
    %v575 = vpop.f32.mrb[0].mxu0
    %576 = vmatprep.mubr.f32.mxu0 %v365
    %577 = vmatmul.mubr.f32.gmra.mrb[0].mxu0 %v364
    %v578 = vpop.f32.mrb[0].mxu0
    %v579 = vadd.f32 %v504, %v578
    %v580 = vpop.f32.mrb[0].mxu0
    %581 = vdwg.mxu0
    %v582 = vadd.f32 %v366, %v574
    %v583 = vadd.f32 %v367, %v579
    %584 = vst [vmem:[#allocation2] sm:$0xff] %v582
    %585 = vst [vmem:[#allocation2 + $0x8] sm:$0xff] %v583
    // Predicated region
    $region38: #{tpu_custom_call.1} parent=1 // pred_check
      %p586 = pneg %p62
    $region39: #{tpu_custom_call.1} parent=1 // pred_check_branch
      %588 = sbr.rel (%p586) target = $region41
    $region40: #{tpu_custom_call.1} parent=1 // pred_region
      %v589 = vld [vmem:[#allocation2] sm:$0xff]
      %v590 = vld [vmem:[#allocation2 + $0x8] sm:$0xff]
      %v591 = vld [vmem:[%s4] sm:$0x1]
      %v593 = vlaneseq
      %v594 = vshrl.u32 %v593, 7
      %v595 = vsub.s32 0, %v594
      %v596 = vrot.slane %v591, %v595
      %v598 = vadd.f32 %v589, %v596
      %v599 = vadd.f32 %v590, %v596
      %600 = vst [vmem:[#allocation9] sm:$0xff] %v598
      %601 = vst [vmem:[#allocation9 + $0x8] sm:$0xff] %v599
    $region41: #{tpu_custom_call.1} parent=1 // pred_fallthru
      _
    // Predicated region
    $region42: #{tpu_custom_call.1} parent=1 // pred_check
      _
    $region43: #{tpu_custom_call.1} parent=1 // pred_check_branch
      %603 = sbr.rel (0) target = $region45
    $region44: #{tpu_custom_call.1} parent=1 // pred_region
      %s605 = ssub.s32 256, 256
      %606 = vsyncadd [#allocation5], %s605
      %s607 = sshll.u32 [#allocation9], 4
      %s608 = int_to_ptr.vmem [resolvable:$true] %s607
      %613 = dma.vmem_to_hbm [thread:$0]  %s608, 256, %s5, [#allocation5], 128, 128, 8
    $region45: #{tpu_custom_call.1} parent=1 // pred_fallthru
      _
    // Predicated region
    $region46: #{tpu_custom_call.1} parent=1 // pred_check
      _
    $region47: #{tpu_custom_call.1} parent=1 // pred_check_branch
      %615 = sbr.rel (0) target = $region49
    $region48: #{tpu_custom_call.1} parent=1 // pred_region
      %616 = dma.done [#allocation5], 256
    $region49: #{tpu_custom_call.1} parent=1 // pred_fallthru
      _
    %617 = vsyncpa [#allocation4], 1
    %618 = vsyncpa [#allocation7], 1
    %619 = vsyncpa [#allocation5], 1

</llo_original>
